<compile_context>
chip_gen: v7x
topology: tpu7x:2x2x1
jax: 0.10.0
libtpu: 0.0.40
codegen_flags: <defaults>
</compile_context>

<pallas_src>
import functools

import jax
import jax.numpy as jnp
from jax.experimental import pallas as pl
from jax.experimental.pallas import tpu as pltpu

_LANE = 128  # lane width (last dim) -- also used for the node dim now


def _round_up(x, m):
    return (x + m - 1) // m * m


def _pad2(arr, rows, cols, dtype):
    r, c = arr.shape
    return jnp.pad(arr.astype(dtype), ((0, rows - r), (0, cols - c)))


@functools.lru_cache(maxsize=1)
def _vmem_limit_bytes():
    """~75% of physical VMEM: ~96 MiB on v5e/v6e (128 MiB), ~48 MiB on v7x (64 MiB)."""
    try:
        cap = pltpu.get_tpu_info().vmem_capacity_bytes
        return int(cap) * 3 // 4
    except Exception:
        return 64 * 1024 * 1024  # conservative fallback


def _gcnt1_fused_kernel(a_hbm_ref, x_ref, w1t_ref, b1_ref, w2t_ref, b2_ref,
                        h_ref, out_ref, a_vmem, dma_sem):
    """Fused two-layer GCN forward; A_hat DMA overlapped with layer-1 matmul.

    a_hbm_ref : (Np, Np)         bf16  normalized adjacency, raw HBM ref
    x_ref     : (Np, Cin_p)      bf16  vertex features (zero-padded), VMEM
    w1t_ref   : (Cin_p, Chid_p)  bf16  layer-1 weight^T (padded), VMEM
    b1_ref    : (1, Chid_p)      f32
    w2t_ref   : (Chid_p, Ccls_p) bf16  layer-2 weight^T (padded), VMEM
    b2_ref    : (1, Ccls_p)      f32
    h_ref     : (Np, Chid_p)     f32   layer-1 output (post-ReLU)
    out_ref   : (Np, Ccls_p)     f32   layer-2 output (logits)
    a_vmem    : (Np, Np)         bf16  VMEM scratch for A_hat
    dma_sem   : DMA semaphore
    """
    # Kick off the (largest) A_hat transfer; hide it behind X @ W1^T.
    a_copy = pltpu.make_async_copy(a_hbm_ref, a_vmem, dma_sem)
    a_copy.start()

    # ---- layer 1 feature transform: xw = X @ W1^T + b1 ----
    xw = jnp.dot(x_ref[...], w1t_ref[...], preferred_element_type=jnp.float32)
    xw = (xw + b1_ref[...]).astype(jnp.bfloat16)

    a_copy.wait()
    a = a_vmem[...]

    # ---- layer 1 aggregate + ReLU: h = relu(A_hat @ xw) ----
    h = jnp.dot(a, xw, preferred_element_type=jnp.float32)
    h = jnp.maximum(h, 0.0)
    h_ref[...] = h

    # ---- layer 2: out = A_hat @ (h @ W2^T + b2) ----
    hw = jnp.dot(h.astype(jnp.bfloat16), w2t_ref[...],
                 preferred_element_type=jnp.float32)
    hw = (hw + b2_ref[...]).astype(jnp.bfloat16)
    out_ref[...] = jnp.dot(a, hw, preferred_element_type=jnp.float32)


@jax.jit
def gcnt1_forward(x, a_hat, params):
    """GCNT1.forward: returns [hidden_out, logits_out]."""
    n, c_in = x.shape
    c_hid = params["w1"].shape[0]
    n_cls = params["w2"].shape[0]

    # Node dim padded to 128 so the contraction/lane dim of both A@ matmuls
    # is lane-dense and bf16 sublane packing (16 rows) is satisfied.
    n_p = _round_up(n, _LANE)
    cin_p = _round_up(c_in, _LANE)
    chid_p = _round_up(c_hid, _LANE)
    ccls_p = _round_up(n_cls, _LANE)

    # Pad + cast (fused by XLA inside this jit). Zero padding is exact:
    # padded A rows/cols are zero, so padded contributions are annihilated and
    # padded output rows are zero; the wrapper slices the pad off.
    a_p = _pad2(a_hat, n_p, n_p, jnp.bfloat16)
    x_p = _pad2(x, n_p, cin_p, jnp.bfloat16)
    w1t = _pad2(params["w1"].T, cin_p, chid_p, jnp.bfloat16)
    w2t = _pad2(params["w2"].T, chid_p, ccls_p, jnp.bfloat16)
    b1 = _pad2(params["b1"].reshape(1, -1), 1, chid_p, jnp.float32)
    b2 = _pad2(params["b2"].reshape(1, -1), 1, ccls_p, jnp.float32)

    flops = (2 * n_p * cin_p * chid_p + 2 * n_p * n_p * chid_p
             + 2 * n_p * chid_p * ccls_p + 2 * n_p * n_p * ccls_p)
    bytes_accessed = (2 * (a_p.size + x_p.size + w1t.size + w2t.size)
                      + 4 * (b1.size + b2.size)
                      + 4 * (n_p * chid_p + n_p * ccls_p))
    cost = pl.CostEstimate(flops=flops, transcendentals=0,
                           bytes_accessed=bytes_accessed)

    vmem_spec = pl.BlockSpec(memory_space=pltpu.MemorySpace.VMEM)

    h_pad, out_pad = pl.pallas_call(
        _gcnt1_fused_kernel,
        out_shape=(jax.ShapeDtypeStruct((n_p, chid_p), jnp.float32),
                   jax.ShapeDtypeStruct((n_p, ccls_p), jnp.float32)),
        # No grid: single invocation, no pipeline, single-buffered operands.
        in_specs=[
            pl.BlockSpec(memory_space=pl.ANY),  # A_hat stays in HBM; kernel DMAs it
            vmem_spec,   # X
            vmem_spec,   # W1^T
            vmem_spec,   # b1
            vmem_spec,   # W2^T
            vmem_spec,   # b2
        ],
        out_specs=(vmem_spec, vmem_spec),
        scratch_shapes=[
            pltpu.VMEM((n_p, n_p), jnp.bfloat16),  # A_hat landing buffer
            pltpu.SemaphoreType.DMA,
        ],
        compiler_params=pltpu.CompilerParams(
            vmem_limit_bytes=_vmem_limit_bytes(),
        ),
        cost_estimate=cost,
    )(a_p, x_p, w1t, b1, w2t, b2)

    return [h_pad[:n, :c_hid], out_pad[:n, :n_cls]]


def build_gcn_adjacency(key, n):
    """Deterministic small random undirected graph -> D^{-1/2}(A+I)D^{-1/2}."""
    raw = jax.random.bernoulli(key, p=0.3, shape=(n, n)).astype(jnp.float32)
    upper = jnp.triu(raw, k=1)
    adj = upper + upper.T                      # symmetric, zero diagonal
    adj = adj + jnp.eye(n, dtype=jnp.float32)  # add self-loops
    deg = adj.sum(axis=1)
    d_inv_sqrt = 1.0 / jnp.sqrt(deg)
    return adj * d_inv_sqrt[:, None] * d_inv_sqrt[None, :]


def init_linear(key, in_c, out_c):
    """Deterministic init matching nn.Linear shapes (kaiming-uniform-like)."""
    kw, kb = jax.random.split(key)
    bound = 1.0 / jnp.sqrt(jnp.float32(in_c))
    w = jax.random.uniform(kw, (out_c, in_c), jnp.float32, -bound, bound)
    b = jax.random.uniform(kb, (out_c,), jnp.float32, -bound, bound)
    return w, b


if __name__ == "__main__":
    N = 16            # number of vertices
    C_IN = 32         # in_channels
    C_HID = 32        # hid_channels
    N_CLASSES = 8     # num_classes

    root = jax.random.PRNGKey(0)
    k_x, k_g, k_l1, k_l2 = jax.random.split(root, 4)

    x = jax.random.normal(k_x, (N, C_IN), jnp.float32)
    a_hat = build_gcn_adjacency(k_g, N)

    w1, b1 = init_linear(k_l1, C_IN, C_HID)
    w2, b2 = init_linear(k_l2, C_HID, N_CLASSES)
    params = {"w1": w1, "b1": b1, "w2": w2, "b2": b2}

    outs = gcnt1_forward(x, a_hat, params)
    outs = jax.block_until_ready(outs)

    # Sanity check vs pure-JAX f32 reference. Tolerances are loosened because
    # the kernel uses bf16 MXU operands (f32 accumulation).
    ref_h = jnp.maximum(a_hat @ (x @ w1.T + b1), 0.0)
    ref_o = a_hat @ (ref_h @ w2.T + b2)
    assert outs[0].shape == (N, C_HID) and outs[1].shape == (N, N_CLASSES)
    assert jnp.allclose(outs[0], ref_h, atol=5e-2, rtol=5e-2)
    assert jnp.allclose(outs[1], ref_o, atol=5e-2, rtol=5e-2)

    print("KERNEL_OK")
</pallas_src>

<mosaic_0001>
module attributes {stable_mosaic.version = 11 : i64} {
  func.func @_gcnt1_fused_kernel(%arg0: memref<128x128xbf16, #tpu.memory_space<any>>, %arg1: memref<128x128xbf16, #tpu.memory_space<vmem>>, %arg2: memref<128x128xbf16, #tpu.memory_space<vmem>>, %arg3: memref<1x128xf32, #tpu.memory_space<vmem>>, %arg4: memref<128x128xbf16, #tpu.memory_space<vmem>>, %arg5: memref<1x128xf32, #tpu.memory_space<vmem>>, %arg6: memref<128x128xf32, #tpu.memory_space<vmem>>, %arg7: memref<128x128xf32, #tpu.memory_space<vmem>>, %arg8: memref<128x128xbf16, #tpu.memory_space<vmem>>, %arg9: memref<!tpu.dma_semaphore, #tpu.memory_space<semaphore_mem>>) attributes {dimension_semantics = [], scalar_prefetch = 0 : i64, scratch_operands = 2 : i64, tpu.core_type = #tpu.core_type<tc>} {
    tpu.enqueue_dma source(%arg0 : memref<128x128xbf16, #tpu.memory_space<any>>) target(%arg8 : memref<128x128xbf16, #tpu.memory_space<vmem>>) target_semaphore(%arg9 : memref<!tpu.dma_semaphore, #tpu.memory_space<semaphore_mem>>)
    %c0 = arith.constant 0 : index
    %c0_0 = arith.constant 0 : index
    %0 = vector.load %arg1[%c0, %c0_0] : memref<128x128xbf16, #tpu.memory_space<vmem>>, vector<128x128xbf16>
    %c0_1 = arith.constant 0 : index
    %c0_2 = arith.constant 0 : index
    %1 = vector.load %arg2[%c0_1, %c0_2] : memref<128x128xbf16, #tpu.memory_space<vmem>>, vector<128x128xbf16>
    %cst = arith.constant dense<0.000000e+00> : vector<128x128xf32>
    %2 = tpu.matmul %0, %1, %cst {dimension_numbers = #tpu.dot_dimension_numbers<[1], [0], [0], [1], [0, 0, 1, 1], [], []>} : vector<128x128xbf16>, vector<128x128xbf16>, vector<128x128xf32> -> vector<128x128xf32>
    %c0_3 = arith.constant 0 : index
    %c0_4 = arith.constant 0 : index
    %3 = vector.load %arg3[%c0_3, %c0_4] : memref<1x128xf32, #tpu.memory_space<vmem>>, vector<1x128xf32>
    %4 = vector.broadcast %3 : vector<1x128xf32> to vector<128x128xf32>
    %5 = arith.addf %2, %4 : vector<128x128xf32>
    %6 = arith.truncf %5 : vector<128x128xf32> to vector<128x128xbf16>
    tpu.wait_dma2 semaphore(%arg9 : memref<!tpu.dma_semaphore, #tpu.memory_space<semaphore_mem>>) src(%arg0 : memref<128x128xbf16, #tpu.memory_space<any>>) dst(%arg8 : memref<128x128xbf16, #tpu.memory_space<vmem>>)
    %c0_5 = arith.constant 0 : index
    %c0_6 = arith.constant 0 : index
    %7 = vector.load %arg8[%c0_5, %c0_6] : memref<128x128xbf16, #tpu.memory_space<vmem>>, vector<128x128xbf16>
    %cst_7 = arith.constant dense<0.000000e+00> : vector<128x128xf32>
    %8 = tpu.matmul %7, %6, %cst_7 {dimension_numbers = #tpu.dot_dimension_numbers<[1], [0], [0], [1], [0, 0, 1, 1], [], []>} : vector<128x128xbf16>, vector<128x128xbf16>, vector<128x128xf32> -> vector<128x128xf32>
    %cst_8 = arith.constant 0.000000e+00 : f32
    %9 = vector.broadcast %cst_8 : f32 to vector<128x128xf32>
    %10 = arith.maximumf %8, %9 : vector<128x128xf32>
    %c0_9 = arith.constant 0 : index
    %c0_10 = arith.constant 0 : index
    %11 = vector.load %arg6[%c0_9, %c0_10] : memref<128x128xf32, #tpu.memory_space<vmem>>, vector<128x128xf32>
    tpu.vector_store %arg6[%c0_9, %c0_10], %10 {strides = array<i32>} : memref<128x128xf32, #tpu.memory_space<vmem>>, vector<128x128xf32>,
    %12 = arith.truncf %10 : vector<128x128xf32> to vector<128x128xbf16>
    %c0_11 = arith.constant 0 : index
    %c0_12 = arith.constant 0 : index
    %13 = vector.load %arg4[%c0_11, %c0_12] : memref<128x128xbf16, #tpu.memory_space<vmem>>, vector<128x128xbf16>
    %cst_13 = arith.constant dense<0.000000e+00> : vector<128x128xf32>
    %14 = tpu.matmul %12, %13, %cst_13 {dimension_numbers = #tpu.dot_dimension_numbers<[1], [0], [0], [1], [0, 0, 1, 1], [], []>} : vector<128x128xbf16>, vector<128x128xbf16>, vector<128x128xf32> -> vector<128x128xf32>
    %c0_14 = arith.constant 0 : index
    %c0_15 = arith.constant 0 : index
    %15 = vector.load %arg5[%c0_14, %c0_15] : memref<1x128xf32, #tpu.memory_space<vmem>>, vector<1x128xf32>
    %16 = vector.broadcast %15 : vector<1x128xf32> to vector<128x128xf32>
    %17 = arith.addf %14, %16 : vector<128x128xf32>
    %18 = arith.truncf %17 : vector<128x128xf32> to vector<128x128xbf16>
    %cst_16 = arith.constant dense<0.000000e+00> : vector<128x128xf32>
    %19 = tpu.matmul %7, %18, %cst_16 {dimension_numbers = #tpu.dot_dimension_numbers<[1], [0], [0], [1], [0, 0, 1, 1], [], []>} : vector<128x128xbf16>, vector<128x128xbf16>, vector<128x128xf32> -> vector<128x128xf32>
    %c0_17 = arith.constant 0 : index
    %c0_18 = arith.constant 0 : index
    %20 = vector.load %arg7[%c0_17, %c0_18] : memref<128x128xf32, #tpu.memory_space<vmem>>, vector<128x128xf32>
    tpu.vector_store %arg7[%c0_17, %c0_18], %19 {strides = array<i32>} : memref<128x128xf32, #tpu.memory_space<vmem>>, vector<128x128xf32>,
    return
  }
}

</mosaic_0001>

<llo_original>
// kernel: gcnt1_forward.1
$region0: #{gcnt1_forward.1}
  #allocation0 [shape = 'u32[]', space=smem, size = 0x4, offset = 0x4, fixed_abs, tag = 'smem constant byte address 0x4 - core index']
  #allocation1 [shape = 'u32[144,128]{1,0:T(1,128)}', space=vmem, size = 0x12000, scoped, tag = 'internal scratch']
  #allocation2 [shape = 'bf16[128,128]{1,0:T(16,128)(2,1)}', space=vmem, size = 0x8000, scoped, tag = 'scratch operand']
  #allocation3 [shape = 's32[1]{0}', space=sflag, size = 0x4, scoped, tag = 'scratch operand']
  #allocation16 [shape = 's32[]', space=sflag, size = 0x4, offset = 0, fixed_abs, tag = 'sflag constant byte address 0x0 - dummy sync flag']
  #allocation17 [shape = 's32[]', space=sflag, size = 0x4, offset = 0, fixed_abs, tag = 'sflag constant byte address 0x0 - dummy sync flag']
  #allocation18 [shape = 'u32[]', space=smem, size = 0x4, offset = 0x44, fixed_abs, tag = 'smem constant byte address 0x44 - assertion arg 0']
  #allocation19 [shape = 'u32[]', space=smem, size = 0x4, offset = 0x48, fixed_abs, tag = 'smem constant byte address 0x48 - assertion arg 1']
  %s0 = inlined_call_operand.hbm [shape: bf16[128,128], index: 0, kind: input, shape index: {}]
  %s1 = inlined_call_operand.hbm [shape: bf16[128,128], index: 1, kind: input, shape index: {}]
  %s2 = inlined_call_operand.hbm [shape: bf16[128,128], index: 2, kind: input, shape index: {}]
  %s3 = inlined_call_operand.hbm [shape: f32[1,128], index: 3, kind: input, shape index: {}]
  %s4 = inlined_call_operand.hbm [shape: bf16[128,128], index: 4, kind: input, shape index: {}]
  %s5 = inlined_call_operand.hbm [shape: f32[1,128], index: 5, kind: input, shape index: {}]
  %s6 = inlined_call_operand.hbm [shape: f32[128,128], index: 6, kind: output, shape index: {0}]
  %s7 = inlined_call_operand.hbm [shape: f32[128,128], index: 7, kind: output, shape index: {1}]
  %8 = xla_tuple %s6, %s7
  %s9 = sld [smem:[#allocation0]]
  $region62: #{gcnt1_forward.1} parent=0
    _
  %s11 = ssub.s32 1, %s9
  %s12 = scalar_select 0, %s11, %s9
  $region1: #{gcnt1_forward.1} parent=0
    #allocation4 [shape = 'u8[32768]{0}', space=vmem, size = 0x8000, scoped, tag = 'input window, operand 1, single buffered']
    #allocation5 [shape = 's32[1]{0}', space=sflag, size = 0x4, scoped, tag = 'scoped memory for gcnt1_forward.1']
    #allocation6 [shape = 's32[1]{0}', space=sflag, size = 0x4, scoped, tag = 'scoped memory for gcnt1_forward.1']
    #allocation7 [shape = 'u8[32768]{0}', space=vmem, size = 0x8000, scoped, tag = 'input window, operand 2, single buffered']
    #allocation8 [shape = 's32[1]{0}', space=sflag, size = 0x4, scoped, tag = 'scoped memory for gcnt1_forward.1']
    #allocation9 [shape = 'u8[512]{0}', space=vmem, size = 0x400, scoped, tag = 'input window, operand 3, single buffered']
    #allocation10 [shape = 'u8[32768]{0}', space=vmem, size = 0x8000, scoped, tag = 'input window, operand 4, single buffered']
    #allocation11 [shape = 's32[1]{0}', space=sflag, size = 0x4, scoped, tag = 'scoped memory for gcnt1_forward.1']
    #allocation12 [shape = 'u8[512]{0}', space=vmem, size = 0x400, scoped, tag = 'input window, operand 5, single buffered']
    #allocation13 [shape = 'u8[65536]{0}', space=vmem, size = 0x10000, scoped, tag = 'output window, operand 0, single buffered']
    #allocation14 [shape = 'u8[65536]{0}', space=vmem, size = 0x10000, scoped, tag = 'output window, operand 1, single buffered']
    #allocation15 [shape = 's32[1]{0}', space=sflag, size = 0x4, scoped, tag = 'scoped memory for gcnt1_forward.1']
    %13 = vsyncpa [#allocation5], 0
    %14 = vsyncpa [#allocation8], 0
    %15 = vsyncpa [#allocation11], 0
    %16 = vsyncpa [#allocation6], 0
    %17 = vsyncpa [#allocation15], 0
    // Predicated region
    $region2: #{gcnt1_forward.1} parent=1 // pred_check
      _
    $region3: #{gcnt1_forward.1} parent=1 // pred_check_branch
      %19 = sbr.rel (0) target = $region5
    $region4: #{gcnt1_forward.1} parent=1 // pred_region
      %s21 = ssub.s32 1024, 1024
      %22 = vsyncadd [#allocation5], %s21
      %s23 = sshll.u32 [#allocation4], 4
      %s24 = int_to_ptr.vmem [resolvable:$true] %s23
      %29 = dma.hbm_to_vmem [thread:$0]  %s1, 1024, %s24, [#allocation5], 64, 64, 4
    $region5: #{gcnt1_forward.1} parent=1 // pred_fallthru
      _
    // Predicated region
    $region6: #{gcnt1_forward.1} parent=1 // pred_check
      _
    $region7: #{gcnt1_forward.1} parent=1 // pred_check_branch
      %31 = sbr.rel (0) target = $region9
    $region8: #{gcnt1_forward.1} parent=1 // pred_region
      %s33 = ssub.s32 1024, 1024
      %34 = vsyncadd [#allocation8], %s33
      %s35 = sshll.u32 [#allocation7], 4
      %s36 = int_to_ptr.vmem [resolvable:$true] %s35
      %41 = dma.hbm_to_vmem [thread:$0]  %s2, 1024, %s36, [#allocation8], 64, 64, 4
    $region9: #{gcnt1_forward.1} parent=1 // pred_fallthru
      _
    // Predicated region
    $region10: #{gcnt1_forward.1} parent=1 // pred_check
      _
    $region11: #{gcnt1_forward.1} parent=1 // pred_check_branch
      %43 = sbr.rel (0) target = $region13
    $region12: #{gcnt1_forward.1} parent=1 // pred_region
      %s45 = ssub.s32 16, 16
      %46 = vsyncadd [#allocation8], %s45
      %s48 = sshll.u32 [#allocation9], 4
      %s49 = int_to_ptr.vmem [resolvable:$true] %s48
      %51 = dma.hbm_to_vmem [thread:$0]  %s3, 16, %s49, [#allocation8]
    $region13: #{gcnt1_forward.1} parent=1 // pred_fallthru
      _
    // Predicated region
    $region14: #{gcnt1_forward.1} parent=1 // pred_check
      _
    $region15: #{gcnt1_forward.1} parent=1 // pred_check_branch
      %53 = sbr.rel (0) target = $region17
    $region16: #{gcnt1_forward.1} parent=1 // pred_region
      %s55 = ssub.s32 1024, 1024
      %56 = vsyncadd [#allocation11], %s55
      %s57 = sshll.u32 [#allocation10], 4
      %s58 = int_to_ptr.vmem [resolvable:$true] %s57
      %63 = dma.hbm_to_vmem [thread:$0]  %s4, 1024, %s58, [#allocation11], 64, 64, 4
    $region17: #{gcnt1_forward.1} parent=1 // pred_fallthru
      _
    // Predicated region
    $region18: #{gcnt1_forward.1} parent=1 // pred_check
      _
    $region19: #{gcnt1_forward.1} parent=1 // pred_check_branch
      %65 = sbr.rel (0) target = $region21
    $region20: #{gcnt1_forward.1} parent=1 // pred_region
      %s67 = ssub.s32 16, 16
      %68 = vsyncadd [#allocation11], %s67
      %s70 = sshll.u32 [#allocation12], 4
      %s71 = int_to_ptr.vmem [resolvable:$true] %s70
      %73 = dma.hbm_to_vmem [thread:$0]  %s5, 16, %s71, [#allocation11]
    $region21: #{gcnt1_forward.1} parent=1 // pred_fallthru
      _
    // Predicated region
    $region22: #{gcnt1_forward.1} parent=1 // pred_check
      _
    $region23: #{gcnt1_forward.1} parent=1 // pred_check_branch
      %75 = sbr.rel (0) target = $region25
    $region24: #{gcnt1_forward.1} parent=1 // pred_region
      %76 = dma.done [#allocation5], 1024
    $region25: #{gcnt1_forward.1} parent=1 // pred_fallthru
      _
    // Predicated region
    $region26: #{gcnt1_forward.1} parent=1 // pred_check
      _
    $region27: #{gcnt1_forward.1} parent=1 // pred_check_branch
      %78 = sbr.rel (0) target = $region29
    $region28: #{gcnt1_forward.1} parent=1 // pred_region
      %79 = dma.done [#allocation8], 1024
    $region29: #{gcnt1_forward.1} parent=1 // pred_fallthru
      _
    // Predicated region
    $region30: #{gcnt1_forward.1} parent=1 // pred_check
      _
    $region31: #{gcnt1_forward.1} parent=1 // pred_check_branch
      %81 = sbr.rel (0) target = $region33
    $region32: #{gcnt1_forward.1} parent=1 // pred_region
      %82 = dma.done [#allocation8], 16
    $region33: #{gcnt1_forward.1} parent=1 // pred_fallthru
      _
    // Predicated region
    $region34: #{gcnt1_forward.1} parent=1 // pred_check
      _
    $region35: #{gcnt1_forward.1} parent=1 // pred_check_branch
      %84 = sbr.rel (0) target = $region37
    $region36: #{gcnt1_forward.1} parent=1 // pred_region
      %85 = dma.done [#allocation11], 1024
    $region37: #{gcnt1_forward.1} parent=1 // pred_fallthru
      _
    // Predicated region
    $region38: #{gcnt1_forward.1} parent=1 // pred_check
      _
    $region39: #{gcnt1_forward.1} parent=1 // pred_check_branch
      %87 = sbr.rel (0) target = $region41
    $region40: #{gcnt1_forward.1} parent=1 // pred_region
      %88 = dma.done [#allocation11], 16
    $region41: #{gcnt1_forward.1} parent=1 // pred_fallthru
      _
    // Predicated region
    $region42: #{gcnt1_forward.1} parent=1 // pred_check
      _
    $region43: #{gcnt1_forward.1} parent=1 // pred_check_branch
      %91 = sbr.rel target = $region45
    $region44: #{gcnt1_forward.1} parent=1 // pred_region
      %92 = sst [smem:[#allocation18]] [#allocation17]
      %93 = sst [smem:[#allocation19]] [#allocation16]
    $region45: #{gcnt1_forward.1} parent=1 // pred_fallthru
      _
    %95 = shalt.err (0)
    %s97 = sshll.u32 [#allocation2], 4
    %s98 = int_to_ptr.vmem [resolvable:$true] %s97
    %100 = dma.hbm_to_vmem [thread:$0]  %s0, 1024, %s98, [#allocation3]
    %v101 = vld [vmem:[#allocation4] sm:$0xf]
    %v102 = vld [vmem:[#allocation4 + $0x4] sm:$0xf]
    %v103 = vld [vmem:[#allocation4 + $0x8] sm:$0xf]
    %v104 = vld [vmem:[#allocation4 + $0xc] sm:$0xf]
    %v105 = vld [vmem:[#allocation4 + $0x10] sm:$0xf]
    %v106 = vld [vmem:[#allocation4 + $0x14] sm:$0xf]
    %v107 = vld [vmem:[#allocation4 + $0x18] sm:$0xf]
    %v108 = vld [vmem:[#allocation4 + $0x1c] sm:$0xf]
    %v109 = vld [vmem:[#allocation4 + $0x20] sm:$0xf]
    %v110 = vld [vmem:[#allocation4 + $0x24] sm:$0xf]
    %v111 = vld [vmem:[#allocation4 + $0x28] sm:$0xf]
    %v112 = vld [vmem:[#allocation4 + $0x2c] sm:$0xf]
    %v113 = vld [vmem:[#allocation4 + $0x30] sm:$0xf]
    %v114 = vld [vmem:[#allocation4 + $0x34] sm:$0xf]
    %v115 = vld [vmem:[#allocation4 + $0x38] sm:$0xf]
    %v116 = vld [vmem:[#allocation4 + $0x3c] sm:$0xf]
    %v117 = vld [vmem:[#allocation7] sm:$0xf]
    %v118 = vld [vmem:[#allocation7 + $0x4] sm:$0xf]
    %v119 = vld [vmem:[#allocation7 + $0x8] sm:$0xf]
    %v120 = vld [vmem:[#allocation7 + $0xc] sm:$0xf]
    %v121 = vld [vmem:[#allocation7 + $0x10] sm:$0xf]
    %v122 = vld [vmem:[#allocation7 + $0x14] sm:$0xf]
    %v123 = vld [vmem:[#allocation7 + $0x18] sm:$0xf]
    %v124 = vld [vmem:[#allocation7 + $0x1c] sm:$0xf]
    %v125 = vld [vmem:[#allocation7 + $0x20] sm:$0xf]
    %v126 = vld [vmem:[#allocation7 + $0x24] sm:$0xf]
    %v127 = vld [vmem:[#allocation7 + $0x28] sm:$0xf]
    %v128 = vld [vmem:[#allocation7 + $0x2c] sm:$0xf]
    %v129 = vld [vmem:[#allocation7 + $0x30] sm:$0xf]
    %v130 = vld [vmem:[#allocation7 + $0x34] sm:$0xf]
    %v131 = vld [vmem:[#allocation7 + $0x38] sm:$0xf]
    %v132 = vld [vmem:[#allocation7 + $0x3c] sm:$0xf]
    %v133 = vld [vmem:[#allocation9] sm:$0x1]
    %v135 = vlaneseq
    %v136 = vshrl.u32 %v135, 7
    %v137 = vsub.s32 0, %v136
    %v138 = vrot.slane %v133, %v137
    %v156 = vunpack.c.l.b16 %v101
    %v157 = vunpack.c.l.b16 %v102
    %v158 = vunpack.c.l.b16 %v103
    %v159 = vunpack.c.l.b16 %v104
    %v160 = vunpack.c.l.b16 %v105
    %v161 = vunpack.c.l.b16 %v106
    %v162 = vunpack.c.l.b16 %v107
    %v163 = vunpack.c.l.b16 %v108
    %v164 = vunpack.c.l.b16 %v109
    %v165 = vunpack.c.l.b16 %v110
    %v166 = vunpack.c.l.b16 %v111
    %v167 = vunpack.c.l.b16 %v112
    %v168 = vunpack.c.l.b16 %v113
    %v169 = vunpack.c.l.b16 %v114
    %v170 = vunpack.c.l.b16 %v115
    %v171 = vunpack.c.l.b16 %v116
    %v172 = vpack.c.b16 %v157, %v156
    %v173 = vpack.c.b16 %v159, %v158
    %v174 = vpack.c.b16 %v161, %v160
    %v175 = vpack.c.b16 %v163, %v162
    %v176 = vpack.c.b16 %v165, %v164
    %v177 = vpack.c.b16 %v167, %v166
    %v178 = vpack.c.b16 %v169, %v168
    %v179 = vpack.c.b16 %v171, %v170
    %v204 = vunpack.c.l.b16 %v117
    %v205 = vunpack.c.l.b16 %v118
    %v206 = vunpack.c.l.b16 %v119
    %v207 = vunpack.c.l.b16 %v120
    %v208 = vunpack.c.l.b16 %v121
    %v209 = vunpack.c.l.b16 %v122
    %v210 = vunpack.c.l.b16 %v123
    %v211 = vunpack.c.l.b16 %v124
    %v212 = vunpack.c.l.b16 %v125
    %v213 = vunpack.c.l.b16 %v126
    %v214 = vunpack.c.l.b16 %v127
    %v215 = vunpack.c.l.b16 %v128
    %v216 = vunpack.c.l.b16 %v129
    %v217 = vunpack.c.l.b16 %v130
    %v218 = vunpack.c.l.b16 %v131
    %v219 = vunpack.c.l.b16 %v132
    %v220 = vpack.c.b16 %v205, %v204
    %v221 = vpack.c.b16 %v207, %v206
    %v222 = vpack.c.b16 %v209, %v208
    %v223 = vpack.c.b16 %v211, %v210
    %v224 = vpack.c.b16 %v213, %v212
    %v225 = vpack.c.b16 %v215, %v214
    %v226 = vpack.c.b16 %v217, %v216
    %v227 = vpack.c.b16 %v219, %v218
    %236 = vmatprep.subr.bf16.mxu0 0
    %237 = vmatpush1.bf16.msra.mxu0 %v220
    %238 = vmatprep.subr.bf16.mxu0 0
    %239 = vmatpush1.bf16.msra.mxu0 %v221
    %240 = vmatprep.subr.bf16.mxu0 0
    %241 = vmatpush1.bf16.msra.mxu0 %v222
    %242 = vmatprep.subr.bf16.mxu0 0
    %243 = vmatpush1.bf16.msra.mxu0 %v223
    %244 = vmatprep.subr.bf16.mxu0 0
    %245 = vmatpush1.bf16.msra.mxu0 %v224
    %246 = vmatprep.subr.bf16.mxu0 0
    %247 = vmatpush1.bf16.msra.mxu0 %v225
    %248 = vmatprep.subr.bf16.mxu0 0
    %249 = vmatpush1.bf16.msra.mxu0 %v226
    %250 = vmatprep.subr.bf16.mxu0 0
    %251 = vmatpush1.bf16.msra.mxu0 %v227
    %252 = vmatprep.subr.bf16.mxu0 0
    %253 = vmatpush1.bf16.msra.mxu0 0
    %254 = vmatprep.subr.bf16.mxu0 0
    %255 = vmatpush1.bf16.msra.mxu0 0
    %256 = vmatprep.subr.bf16.mxu0 0
    %257 = vmatpush1.bf16.msra.mxu0 0
    %258 = vmatprep.subr.bf16.mxu0 0
    %259 = vmatpush1.bf16.msra.mxu0 0
    %260 = vmatprep.subr.bf16.mxu0 0
    %261 = vmatpush1.bf16.msra.mxu0 0
    %262 = vmatprep.subr.bf16.mxu0 0
    %263 = vmatpush1.bf16.msra.mxu0 0
    %264 = vmatprep.subr.bf16.mxu0 0
    %265 = vmatpush1.bf16.msra.mxu0 0
    %266 = vmatprep.subr.bf16.mxu0 0
    %267 = vmatpush1.bf16.msra.mxu0 0
    %268 = vmatprep.mubr.bf16.mxu0 0
    %269 = vmatmul.mubr.bf16.gmra.mrb[0].mxu0 %v172
    %v270 = vpop.f32.mrb[0].mxu0
    %v271 = vadd.f32 %v138, %v270
    %v272 = vpop.f32.mrb[0].mxu0
    %v273 = vpop.f32.mrb[0].mxu0
    %v274 = vadd.f32 %v138, %v273
    %v275 = vpop.f32.mrb[0].mxu0
    %276 = vmatprep.mubr.bf16.mxu0 0
    %277 = vmatmul.mubr.bf16.gmra.mrb[0].mxu0 %v173
    %v278 = vpop.f32.mrb[0].mxu0
    %v279 = vadd.f32 %v138, %v278
    %v280 = vpop.f32.mrb[0].mxu0
    %v281 = vpop.f32.mrb[0].mxu0
    %v282 = vadd.f32 %v138, %v281
    %v283 = vpop.f32.mrb[0].mxu0
    %284 = vmatprep.mubr.bf16.mxu0 0
    %285 = vmatmul.mubr.bf16.gmra.mrb[0].mxu0 %v174
    %v286 = vpop.f32.mrb[0].mxu0
    %v287 = vadd.f32 %v138, %v286
    %v288 = vpop.f32.mrb[0].mxu0
    %v289 = vpop.f32.mrb[0].mxu0
    %v290 = vadd.f32 %v138, %v289
    %v291 = vpop.f32.mrb[0].mxu0
    %292 = vmatprep.mubr.bf16.mxu0 0
    %293 = vmatmul.mubr.bf16.gmra.mrb[0].mxu0 %v175
    %v294 = vpop.f32.mrb[0].mxu0
    %v295 = vadd.f32 %v138, %v294
    %v296 = vpop.f32.mrb[0].mxu0
    %v297 = vpop.f32.mrb[0].mxu0
    %v298 = vadd.f32 %v138, %v297
    %v299 = vpop.f32.mrb[0].mxu0
    %300 = vmatprep.mubr.bf16.mxu0 0
    %301 = vmatmul.mubr.bf16.gmra.mrb[0].mxu0 %v176
    %v302 = vpop.f32.mrb[0].mxu0
    %v303 = vadd.f32 %v138, %v302
    %v304 = vpop.f32.mrb[0].mxu0
    %v305 = vpop.f32.mrb[0].mxu0
    %v306 = vadd.f32 %v138, %v305
    %v307 = vpop.f32.mrb[0].mxu0
    %308 = vmatprep.mubr.bf16.mxu0 0
    %309 = vmatmul.mubr.bf16.gmra.mrb[0].mxu0 %v177
    %v310 = vpop.f32.mrb[0].mxu0
    %v311 = vadd.f32 %v138, %v310
    %v312 = vpop.f32.mrb[0].mxu0
    %v313 = vpop.f32.mrb[0].mxu0
    %v314 = vadd.f32 %v138, %v313
    %v315 = vpop.f32.mrb[0].mxu0
    %316 = vmatprep.mubr.bf16.mxu0 0
    %317 = vmatmul.mubr.bf16.gmra.mrb[0].mxu0 %v178
    %v318 = vpop.f32.mrb[0].mxu0
    %v319 = vadd.f32 %v138, %v318
    %v320 = vpop.f32.mrb[0].mxu0
    %v321 = vpop.f32.mrb[0].mxu0
    %v322 = vadd.f32 %v138, %v321
    %v323 = vpop.f32.mrb[0].mxu0
    %324 = vmatprep.mubr.bf16.mxu0 0
    %325 = vmatmul.mubr.bf16.gmra.mrb[0].mxu0 %v179
    %v326 = vpop.f32.mrb[0].mxu0
    %v327 = vadd.f32 %v138, %v326
    %v328 = vpop.f32.mrb[0].mxu0
    %v329 = vpop.f32.mrb[0].mxu0
    %v330 = vadd.f32 %v138, %v329
    %v331 = vpop.f32.mrb[0].mxu0
    %332 = vdwg.mxu0
    %v333 = vpack.c.bf16 %v274, %v271
    %v334 = vpack.c.bf16 %v282, %v279
    %v335 = vpack.c.bf16 %v290, %v287
    %v336 = vpack.c.bf16 %v298, %v295
    %v337 = vpack.c.bf16 %v306, %v303
    %v338 = vpack.c.bf16 %v314, %v311
    %v339 = vpack.c.bf16 %v322, %v319
    %v340 = vpack.c.bf16 %v330, %v327
    %s341 = smul.u32 4, 16
    %s342 = smul.u32 %s341, 1
    %s343 = sshll.u32 %s342, 4
    %344 = dma.done [#allocation3], %s343
    %v345 = vld [vmem:[#allocation2] sm:$0xff]
    %v346 = vld [vmem:[#allocation2 + $0x8] sm:$0xff]
    %v347 = vld [vmem:[#allocation2 + $0x10] sm:$0xff]
    %v348 = vld [vmem:[#allocation2 + $0x18] sm:$0xff]
    %v349 = vld [vmem:[#allocation2 + $0x20] sm:$0xff]
    %v350 = vld [vmem:[#allocation2 + $0x28] sm:$0xff]
    %v351 = vld [vmem:[#allocation2 + $0x30] sm:$0xff]
    %v352 = vld [vmem:[#allocation2 + $0x38] sm:$0xff]
    %353 = vmatprep.subr.bf16.mxu0 0
    %354 = vmatpush1.bf16.msra.mxu0 %v333
    %355 = vmatprep.subr.bf16.mxu0 0
    %356 = vmatpush1.bf16.msra.mxu0 %v334
    %357 = vmatprep.subr.bf16.mxu0 0
    %358 = vmatpush1.bf16.msra.mxu0 %v335
    %359 = vmatprep.subr.bf16.mxu0 0
    %360 = vmatpush1.bf16.msra.mxu0 %v336
    %361 = vmatprep.subr.bf16.mxu0 0
    %362 = vmatpush1.bf16.msra.mxu0 %v337
    %363 = vmatprep.subr.bf16.mxu0 0
    %364 = vmatpush1.bf16.msra.mxu0 %v338
    %365 = vmatprep.subr.bf16.mxu0 0
    %366 = vmatpush1.bf16.msra.mxu0 %v339
    %367 = vmatprep.subr.bf16.mxu0 0
    %368 = vmatpush1.bf16.msra.mxu0 %v340
    %369 = vmatprep.subr.bf16.mxu0 0
    %370 = vmatpush1.bf16.msra.mxu0 0
    %371 = vmatprep.subr.bf16.mxu0 0
    %372 = vmatpush1.bf16.msra.mxu0 0
    %373 = vmatprep.subr.bf16.mxu0 0
    %374 = vmatpush1.bf16.msra.mxu0 0
    %375 = vmatprep.subr.bf16.mxu0 0
    %376 = vmatpush1.bf16.msra.mxu0 0
    %377 = vmatprep.subr.bf16.mxu0 0
    %378 = vmatpush1.bf16.msra.mxu0 0
    %379 = vmatprep.subr.bf16.mxu0 0
    %380 = vmatpush1.bf16.msra.mxu0 0
    %381 = vmatprep.subr.bf16.mxu0 0
    %382 = vmatpush1.bf16.msra.mxu0 0
    %383 = vmatprep.subr.bf16.mxu0 0
    %384 = vmatpush1.bf16.msra.mxu0 0
    %385 = vmatprep.mubr.bf16.mxu0 0
    %386 = vmatmul.mubr.bf16.gmra.mrb[0].mxu0 %v345
    %v387 = vpop.f32.mrb[0].mxu0
    %v388 = vadd.f32 0.0, %v387
    %v389 = vpop.f32.mrb[0].mxu0
    %v390 = vpop.f32.mrb[0].mxu0
    %v391 = vadd.f32 0.0, %v390
    %v392 = vpop.f32.mrb[0].mxu0
    %393 = vmatprep.mubr.bf16.mxu0 0
    %394 = vmatmul.mubr.bf16.gmra.mrb[0].mxu0 %v346
    %v395 = vpop.f32.mrb[0].mxu0
    %v396 = vadd.f32 0.0, %v395
    %v397 = vpop.f32.mrb[0].mxu0
    %v398 = vpop.f32.mrb[0].mxu0
    %v399 = vadd.f32 0.0, %v398
    %v400 = vpop.f32.mrb[0].mxu0
    %401 = vmatprep.mubr.bf16.mxu0 0
    %402 = vmatmul.mubr.bf16.gmra.mrb[0].mxu0 %v347
    %v403 = vpop.f32.mrb[0].mxu0
    %v404 = vadd.f32 0.0, %v403
    %v405 = vpop.f32.mrb[0].mxu0
    %v406 = vpop.f32.mrb[0].mxu0
    %v407 = vadd.f32 0.0, %v406
    %v408 = vpop.f32.mrb[0].mxu0
    %409 = vmatprep.mubr.bf16.mxu0 0
    %410 = vmatmul.mubr.bf16.gmra.mrb[0].mxu0 %v348
    %v411 = vpop.f32.mrb[0].mxu0
    %v412 = vadd.f32 0.0, %v411
    %v413 = vpop.f32.mrb[0].mxu0
    %v414 = vpop.f32.mrb[0].mxu0
    %v415 = vadd.f32 0.0, %v414
    %v416 = vpop.f32.mrb[0].mxu0
    %417 = vmatprep.mubr.bf16.mxu0 0
    %418 = vmatmul.mubr.bf16.gmra.mrb[0].mxu0 %v349
    %v419 = vpop.f32.mrb[0].mxu0
    %v420 = vadd.f32 0.0, %v419
    %v421 = vpop.f32.mrb[0].mxu0
    %v422 = vpop.f32.mrb[0].mxu0
    %v423 = vadd.f32 0.0, %v422
    %v424 = vpop.f32.mrb[0].mxu0
    %425 = vmatprep.mubr.bf16.mxu0 0
    %426 = vmatmul.mubr.bf16.gmra.mrb[0].mxu0 %v350
    %v427 = vpop.f32.mrb[0].mxu0
    %v428 = vadd.f32 0.0, %v427
    %v429 = vpop.f32.mrb[0].mxu0
    %v430 = vpop.f32.mrb[0].mxu0
    %v431 = vadd.f32 0.0, %v430
    %v432 = vpop.f32.mrb[0].mxu0
    %433 = vmatprep.mubr.bf16.mxu0 0
    %434 = vmatmul.mubr.bf16.gmra.mrb[0].mxu0 %v351
    %v435 = vpop.f32.mrb[0].mxu0
    %v436 = vadd.f32 0.0, %v435
    %v437 = vpop.f32.mrb[0].mxu0
    %v438 = vpop.f32.mrb[0].mxu0
    %v439 = vadd.f32 0.0, %v438
    %v440 = vpop.f32.mrb[0].mxu0
    %441 = vmatprep.mubr.bf16.mxu0 0
    %442 = vmatmul.mubr.bf16.gmra.mrb[0].mxu0 %v352
    %v443 = vpop.f32.mrb[0].mxu0
    %v444 = vadd.f32 0.0, %v443
    %v445 = vpop.f32.mrb[0].mxu0
    %v446 = vpop.f32.mrb[0].mxu0
    %v447 = vadd.f32 0.0, %v446
    %v448 = vpop.f32.mrb[0].mxu0
    %449 = vdwg.mxu0
    %v450 = vmax.f32 %v388, 0.0
    %v451 = vmax.f32 %v391, 0.0
    %v452 = vmax.f32 %v396, 0.0
    %v453 = vmax.f32 %v399, 0.0
    %v454 = vmax.f32 %v404, 0.0
    %v455 = vmax.f32 %v407, 0.0
    %v456 = vmax.f32 %v412, 0.0
    %v457 = vmax.f32 %v415, 0.0
    %v458 = vmax.f32 %v420, 0.0
    %v459 = vmax.f32 %v423, 0.0
    %v460 = vmax.f32 %v428, 0.0
    %v461 = vmax.f32 %v431, 0.0
    %v462 = vmax.f32 %v436, 0.0
    %v463 = vmax.f32 %v439, 0.0
    %v464 = vmax.f32 %v444, 0.0
    %v465 = vmax.f32 %v447, 0.0
    %466 = vst [vmem:[#allocation13] sm:$0xff] %v450
    %467 = vst [vmem:[#allocation13 + $0x8] sm:$0xff] %v451
    %468 = vst [vmem:[#allocation13 + $0x10] sm:$0xff] %v452
    %469 = vst [vmem:[#allocation13 + $0x18] sm:$0xff] %v453
    %470 = vst [vmem:[#allocation13 + $0x20] sm:$0xff] %v454
    %471 = vst [vmem:[#allocation13 + $0x28] sm:$0xff] %v455
    %472 = vst [vmem:[#allocation13 + $0x30] sm:$0xff] %v456
    %473 = vst [vmem:[#allocation13 + $0x38] sm:$0xff] %v457
    %474 = vst [vmem:[#allocation13 + $0x40] sm:$0xff] %v458
    %475 = vst [vmem:[#allocation13 + $0x48] sm:$0xff] %v459
    %476 = vst [vmem:[#allocation13 + $0x50] sm:$0xff] %v460
    %477 = vst [vmem:[#allocation13 + $0x58] sm:$0xff] %v461
    %478 = vst [vmem:[#allocation13 + $0x60] sm:$0xff] %v462
    %479 = vst [vmem:[#allocation13 + $0x68] sm:$0xff] %v463
    %480 = vst [vmem:[#allocation13 + $0x70] sm:$0xff] %v464
    %481 = vst [vmem:[#allocation13 + $0x78] sm:$0xff] %v465
    %v482 = vpack.c.bf16 %v451, %v450
    %v483 = vpack.c.bf16 %v453, %v452
    %v484 = vpack.c.bf16 %v455, %v454
    %v485 = vpack.c.bf16 %v457, %v456
    %v486 = vpack.c.bf16 %v459, %v458
    %v487 = vpack.c.bf16 %v461, %v460
    %v488 = vpack.c.bf16 %v463, %v462
    %v489 = vpack.c.bf16 %v465, %v464
    %v490 = vld [vmem:[#allocation10] sm:$0xf]
    %v491 = vld [vmem:[#allocation10 + $0x4] sm:$0xf]
    %v492 = vld [vmem:[#allocation10 + $0x8] sm:$0xf]
    %v493 = vld [vmem:[#allocation10 + $0xc] sm:$0xf]
    %v494 = vld [vmem:[#allocation10 + $0x10] sm:$0xf]
    %v495 = vld [vmem:[#allocation10 + $0x14] sm:$0xf]
    %v496 = vld [vmem:[#allocation10 + $0x18] sm:$0xf]
    %v497 = vld [vmem:[#allocation10 + $0x1c] sm:$0xf]
    %v498 = vld [vmem:[#allocation10 + $0x20] sm:$0xf]
    %v499 = vld [vmem:[#allocation10 + $0x24] sm:$0xf]
    %v500 = vld [vmem:[#allocation10 + $0x28] sm:$0xf]
    %v501 = vld [vmem:[#allocation10 + $0x2c] sm:$0xf]
    %v502 = vld [vmem:[#allocation10 + $0x30] sm:$0xf]
    %v503 = vld [vmem:[#allocation10 + $0x34] sm:$0xf]
    %v504 = vld [vmem:[#allocation10 + $0x38] sm:$0xf]
    %v505 = vld [vmem:[#allocation10 + $0x3c] sm:$0xf]
    %v506 = vld [vmem:[#allocation12] sm:$0x1]
    %v508 = vlaneseq
    %v509 = vshrl.u32 %v508, 7
    %v510 = vsub.s32 0, %v509
    %v511 = vrot.slane %v506, %v510
    %v529 = vunpack.c.l.b16 %v490
    %v530 = vunpack.c.l.b16 %v491
    %v531 = vunpack.c.l.b16 %v492
    %v532 = vunpack.c.l.b16 %v493
    %v533 = vunpack.c.l.b16 %v494
    %v534 = vunpack.c.l.b16 %v495
    %v535 = vunpack.c.l.b16 %v496
    %v536 = vunpack.c.l.b16 %v497
    %v537 = vunpack.c.l.b16 %v498
    %v538 = vunpack.c.l.b16 %v499
    %v539 = vunpack.c.l.b16 %v500
    %v540 = vunpack.c.l.b16 %v501
    %v541 = vunpack.c.l.b16 %v502
    %v542 = vunpack.c.l.b16 %v503
    %v543 = vunpack.c.l.b16 %v504
    %v544 = vunpack.c.l.b16 %v505
    %v545 = vpack.c.b16 %v530, %v529
    %v546 = vpack.c.b16 %v532, %v531
    %v547 = vpack.c.b16 %v534, %v533
    %v548 = vpack.c.b16 %v536, %v535
    %v549 = vpack.c.b16 %v538, %v537
    %v550 = vpack.c.b16 %v540, %v539
    %v551 = vpack.c.b16 %v542, %v541
    %v552 = vpack.c.b16 %v544, %v543
    %561 = vmatprep.subr.bf16.mxu0 0
    %562 = vmatpush1.bf16.msra.mxu0 %v545
    %563 = vmatprep.subr.bf16.mxu0 0
    %564 = vmatpush1.bf16.msra.mxu0 %v546
    %565 = vmatprep.subr.bf16.mxu0 0
    %566 = vmatpush1.bf16.msra.mxu0 %v547
    %567 = vmatprep.subr.bf16.mxu0 0
    %568 = vmatpush1.bf16.msra.mxu0 %v548
    %569 = vmatprep.subr.bf16.mxu0 0
    %570 = vmatpush1.bf16.msra.mxu0 %v549
    %571 = vmatprep.subr.bf16.mxu0 0
    %572 = vmatpush1.bf16.msra.mxu0 %v550
    %573 = vmatprep.subr.bf16.mxu0 0
    %574 = vmatpush1.bf16.msra.mxu0 %v551
    %575 = vmatprep.subr.bf16.mxu0 0
    %576 = vmatpush1.bf16.msra.mxu0 %v552
    %577 = vmatprep.subr.bf16.mxu0 0
    %578 = vmatpush1.bf16.msra.mxu0 0
    %579 = vmatprep.subr.bf16.mxu0 0
    %580 = vmatpush1.bf16.msra.mxu0 0
    %581 = vmatprep.subr.bf16.mxu0 0
    %582 = vmatpush1.bf16.msra.mxu0 0
    %583 = vmatprep.subr.bf16.mxu0 0
    %584 = vmatpush1.bf16.msra.mxu0 0
    %585 = vmatprep.subr.bf16.mxu0 0
    %586 = vmatpush1.bf16.msra.mxu0 0
    %587 = vmatprep.subr.bf16.mxu0 0
    %588 = vmatpush1.bf16.msra.mxu0 0
    %589 = vmatprep.subr.bf16.mxu0 0
    %590 = vmatpush1.bf16.msra.mxu0 0
    %591 = vmatprep.subr.bf16.mxu0 0
    %592 = vmatpush1.bf16.msra.mxu0 0
    %593 = vmatprep.mubr.bf16.mxu0 0
    %594 = vmatmul.mubr.bf16.gmra.mrb[0].mxu0 %v482
    %v595 = vpop.f32.mrb[0].mxu0
    %v596 = vadd.f32 %v511, %v595
    %v597 = vpop.f32.mrb[0].mxu0
    %v598 = vpop.f32.mrb[0].mxu0
    %v599 = vadd.f32 %v511, %v598
    %v600 = vpop.f32.mrb[0].mxu0
    %601 = vmatprep.mubr.bf16.mxu0 0
    %602 = vmatmul.mubr.bf16.gmra.mrb[0].mxu0 %v483
    %v603 = vpop.f32.mrb[0].mxu0
    %v604 = vadd.f32 %v511, %v603
    %v605 = vpop.f32.mrb[0].mxu0
    %v606 = vpop.f32.mrb[0].mxu0
    %v607 = vadd.f32 %v511, %v606
    %v608 = vpop.f32.mrb[0].mxu0
    %609 = vmatprep.mubr.bf16.mxu0 0
    %610 = vmatmul.mubr.bf16.gmra.mrb[0].mxu0 %v484
    %v611 = vpop.f32.mrb[0].mxu0
    %v612 = vadd.f32 %v511, %v611
    %v613 = vpop.f32.mrb[0].mxu0
    %v614 = vpop.f32.mrb[0].mxu0
    %v615 = vadd.f32 %v511, %v614
    %v616 = vpop.f32.mrb[0].mxu0
    %617 = vmatprep.mubr.bf16.mxu0 0
    %618 = vmatmul.mubr.bf16.gmra.mrb[0].mxu0 %v485
    %v619 = vpop.f32.mrb[0].mxu0
    %v620 = vadd.f32 %v511, %v619
    %v621 = vpop.f32.mrb[0].mxu0
    %v622 = vpop.f32.mrb[0].mxu0
    %v623 = vadd.f32 %v511, %v622
    %v624 = vpop.f32.mrb[0].mxu0
    %625 = vmatprep.mubr.bf16.mxu0 0
    %626 = vmatmul.mubr.bf16.gmra.mrb[0].mxu0 %v486
    %v627 = vpop.f32.mrb[0].mxu0
    %v628 = vadd.f32 %v511, %v627
    %v629 = vpop.f32.mrb[0].mxu0
    %v630 = vpop.f32.mrb[0].mxu0
    %v631 = vadd.f32 %v511, %v630
    %v632 = vpop.f32.mrb[0].mxu0
    %633 = vmatprep.mubr.bf16.mxu0 0
    %634 = vmatmul.mubr.bf16.gmra.mrb[0].mxu0 %v487
    %v635 = vpop.f32.mrb[0].mxu0
    %v636 = vadd.f32 %v511, %v635
    %v637 = vpop.f32.mrb[0].mxu0
    %v638 = vpop.f32.mrb[0].mxu0
    %v639 = vadd.f32 %v511, %v638
    %v640 = vpop.f32.mrb[0].mxu0
    %641 = vmatprep.mubr.bf16.mxu0 0
    %642 = vmatmul.mubr.bf16.gmra.mrb[0].mxu0 %v488
    %v643 = vpop.f32.mrb[0].mxu0
    %v644 = vadd.f32 %v511, %v643
    %v645 = vpop.f32.mrb[0].mxu0
    %v646 = vpop.f32.mrb[0].mxu0
    %v647 = vadd.f32 %v511, %v646
    %v648 = vpop.f32.mrb[0].mxu0
    %649 = vmatprep.mubr.bf16.mxu0 0
    %650 = vmatmul.mubr.bf16.gmra.mrb[0].mxu0 %v489
    %v651 = vpop.f32.mrb[0].mxu0
    %v652 = vadd.f32 %v511, %v651
    %v653 = vpop.f32.mrb[0].mxu0
    %v654 = vpop.f32.mrb[0].mxu0
    %v655 = vadd.f32 %v511, %v654
    %v656 = vpop.f32.mrb[0].mxu0
    %657 = vdwg.mxu0
    %v658 = vpack.c.bf16 %v599, %v596
    %v659 = vpack.c.bf16 %v607, %v604
    %v660 = vpack.c.bf16 %v615, %v612
    %v661 = vpack.c.bf16 %v623, %v620
    %v662 = vpack.c.bf16 %v631, %v628
    %v663 = vpack.c.bf16 %v639, %v636
    %v664 = vpack.c.bf16 %v647, %v644
    %v665 = vpack.c.bf16 %v655, %v652
    %666 = vmatprep.subr.bf16.mxu0 0
    %667 = vmatpush1.bf16.msra.mxu0 %v658
    %668 = vmatprep.subr.bf16.mxu0 0
    %669 = vmatpush1.bf16.msra.mxu0 %v659
    %670 = vmatprep.subr.bf16.mxu0 0
    %671 = vmatpush1.bf16.msra.mxu0 %v660
    %672 = vmatprep.subr.bf16.mxu0 0
    %673 = vmatpush1.bf16.msra.mxu0 %v661
    %674 = vmatprep.subr.bf16.mxu0 0
    %675 = vmatpush1.bf16.msra.mxu0 %v662
    %676 = vmatprep.subr.bf16.mxu0 0
    %677 = vmatpush1.bf16.msra.mxu0 %v663
    %678 = vmatprep.subr.bf16.mxu0 0
    %679 = vmatpush1.bf16.msra.mxu0 %v664
    %680 = vmatprep.subr.bf16.mxu0 0
    %681 = vmatpush1.bf16.msra.mxu0 %v665
    %682 = vmatprep.subr.bf16.mxu0 0
    %683 = vmatpush1.bf16.msra.mxu0 0
    %684 = vmatprep.subr.bf16.mxu0 0
    %685 = vmatpush1.bf16.msra.mxu0 0
    %686 = vmatprep.subr.bf16.mxu0 0
    %687 = vmatpush1.bf16.msra.mxu0 0
    %688 = vmatprep.subr.bf16.mxu0 0
    %689 = vmatpush1.bf16.msra.mxu0 0
    %690 = vmatprep.subr.bf16.mxu0 0
    %691 = vmatpush1.bf16.msra.mxu0 0
    %692 = vmatprep.subr.bf16.mxu0 0
    %693 = vmatpush1.bf16.msra.mxu0 0
    %694 = vmatprep.subr.bf16.mxu0 0
    %695 = vmatpush1.bf16.msra.mxu0 0
    %696 = vmatprep.subr.bf16.mxu0 0
    %697 = vmatpush1.bf16.msra.mxu0 0
    %698 = vmatprep.mubr.bf16.mxu0 0
    %699 = vmatmul.mubr.bf16.gmra.mrb[0].mxu0 %v345
    %v700 = vpop.f32.mrb[0].mxu0
    %v701 = vadd.f32 0.0, %v700
    %v702 = vpop.f32.mrb[0].mxu0
    %v703 = vpop.f32.mrb[0].mxu0
    %v704 = vadd.f32 0.0, %v703
    %v705 = vpop.f32.mrb[0].mxu0
    %706 = vmatprep.mubr.bf16.mxu0 0
    %707 = vmatmul.mubr.bf16.gmra.mrb[0].mxu0 %v346
    %v708 = vpop.f32.mrb[0].mxu0
    %v709 = vadd.f32 0.0, %v708
    %v710 = vpop.f32.mrb[0].mxu0
    %v711 = vpop.f32.mrb[0].mxu0
    %v712 = vadd.f32 0.0, %v711
    %v713 = vpop.f32.mrb[0].mxu0
    %714 = vmatprep.mubr.bf16.mxu0 0
    %715 = vmatmul.mubr.bf16.gmra.mrb[0].mxu0 %v347
    %v716 = vpop.f32.mrb[0].mxu0
    %v717 = vadd.f32 0.0, %v716
    %v718 = vpop.f32.mrb[0].mxu0
    %v719 = vpop.f32.mrb[0].mxu0
    %v720 = vadd.f32 0.0, %v719
    %v721 = vpop.f32.mrb[0].mxu0
    %722 = vmatprep.mubr.bf16.mxu0 0
    %723 = vmatmul.mubr.bf16.gmra.mrb[0].mxu0 %v348
    %v724 = vpop.f32.mrb[0].mxu0
    %v725 = vadd.f32 0.0, %v724
    %v726 = vpop.f32.mrb[0].mxu0
    %v727 = vpop.f32.mrb[0].mxu0
    %v728 = vadd.f32 0.0, %v727
    %v729 = vpop.f32.mrb[0].mxu0
    %730 = vmatprep.mubr.bf16.mxu0 0
    %731 = vmatmul.mubr.bf16.gmra.mrb[0].mxu0 %v349
    %v732 = vpop.f32.mrb[0].mxu0
    %v733 = vadd.f32 0.0, %v732
    %v734 = vpop.f32.mrb[0].mxu0
    %v735 = vpop.f32.mrb[0].mxu0
    %v736 = vadd.f32 0.0, %v735
    %v737 = vpop.f32.mrb[0].mxu0
    %738 = vmatprep.mubr.bf16.mxu0 0
    %739 = vmatmul.mubr.bf16.gmra.mrb[0].mxu0 %v350
    %v740 = vpop.f32.mrb[0].mxu0
    %v741 = vadd.f32 0.0, %v740
    %v742 = vpop.f32.mrb[0].mxu0
    %v743 = vpop.f32.mrb[0].mxu0
    %v744 = vadd.f32 0.0, %v743
    %v745 = vpop.f32.mrb[0].mxu0
    %746 = vmatprep.mubr.bf16.mxu0 0
    %747 = vmatmul.mubr.bf16.gmra.mrb[0].mxu0 %v351
    %v748 = vpop.f32.mrb[0].mxu0
    %v749 = vadd.f32 0.0, %v748
    %v750 = vpop.f32.mrb[0].mxu0
    %v751 = vpop.f32.mrb[0].mxu0
    %v752 = vadd.f32 0.0, %v751
    %v753 = vpop.f32.mrb[0].mxu0
    %754 = vmatprep.mubr.bf16.mxu0 0
    %755 = vmatmul.mubr.bf16.gmra.mrb[0].mxu0 %v352
    %v756 = vpop.f32.mrb[0].mxu0
    %v757 = vadd.f32 0.0, %v756
    %v758 = vpop.f32.mrb[0].mxu0
    %v759 = vpop.f32.mrb[0].mxu0
    %v760 = vadd.f32 0.0, %v759
    %v761 = vpop.f32.mrb[0].mxu0
    %762 = vdwg.mxu0
    %763 = vst [vmem:[#allocation14] sm:$0xff] %v701
    %764 = vst [vmem:[#allocation14 + $0x8] sm:$0xff] %v704
    %765 = vst [vmem:[#allocation14 + $0x10] sm:$0xff] %v709
    %766 = vst [vmem:[#allocation14 + $0x18] sm:$0xff] %v712
    %767 = vst [vmem:[#allocation14 + $0x20] sm:$0xff] %v717
    %768 = vst [vmem:[#allocation14 + $0x28] sm:$0xff] %v720
    %769 = vst [vmem:[#allocation14 + $0x30] sm:$0xff] %v725
    %770 = vst [vmem:[#allocation14 + $0x38] sm:$0xff] %v728
    %771 = vst [vmem:[#allocation14 + $0x40] sm:$0xff] %v733
    %772 = vst [vmem:[#allocation14 + $0x48] sm:$0xff] %v736
    %773 = vst [vmem:[#allocation14 + $0x50] sm:$0xff] %v741
    %774 = vst [vmem:[#allocation14 + $0x58] sm:$0xff] %v744
    %775 = vst [vmem:[#allocation14 + $0x60] sm:$0xff] %v749
    %776 = vst [vmem:[#allocation14 + $0x68] sm:$0xff] %v752
    %777 = vst [vmem:[#allocation14 + $0x70] sm:$0xff] %v757
    %778 = vst [vmem:[#allocation14 + $0x78] sm:$0xff] %v760
    // Predicated region
    $region46: #{gcnt1_forward.1} parent=1 // pred_check
      _
    $region47: #{gcnt1_forward.1} parent=1 // pred_check_branch
      %780 = sbr.rel (0) target = $region49
    $region48: #{gcnt1_forward.1} parent=1 // pred_region
      %s782 = ssub.s32 2048, 2048
      %783 = vsyncadd [#allocation6], %s782
      %s784 = sshll.u32 [#allocation13], 4
      %s785 = int_to_ptr.vmem [resolvable:$true] %s784
      %790 = dma.vmem_to_hbm [thread:$0]  %s785, 2048, %s6, [#allocation6], 128, 128, 8
    $region49: #{gcnt1_forward.1} parent=1 // pred_fallthru
      _
    // Predicated region
    $region50: #{gcnt1_forward.1} parent=1 // pred_check
      _
    $region51: #{gcnt1_forward.1} parent=1 // pred_check_branch
      %792 = sbr.rel (0) target = $region53
    $region52: #{gcnt1_forward.1} parent=1 // pred_region
      %s794 = ssub.s32 2048, 2048
      %795 = vsyncadd [#allocation15], %s794
      %s796 = sshll.u32 [#allocation14], 4
      %s797 = int_to_ptr.vmem [resolvable:$true] %s796
      %802 = dma.vmem_to_hbm [thread:$0]  %s797, 2048, %s7, [#allocation15], 128, 128, 8
    $region53: #{gcnt1_forward.1} parent=1 // pred_fallthru
      _
    // Predicated region
    $region54: #{gcnt1_forward.1} parent=1 // pred_check
      _
    $region55: #{gcnt1_forward.1} parent=1 // pred_check_branch
      %804 = sbr.rel (0) target = $region57
    $region56: #{gcnt1_forward.1} parent=1 // pred_region
      %805 = dma.done [#allocation6], 2048
    $region57: #{gcnt1_forward.1} parent=1 // pred_fallthru
      _
    // Predicated region
    $region58: #{gcnt1_forward.1} parent=1 // pred_check
      _
    $region59: #{gcnt1_forward.1} parent=1 // pred_check_branch
      %807 = sbr.rel (0) target = $region61
    $region60: #{gcnt1_forward.1} parent=1 // pred_region
      %808 = dma.done [#allocation15], 2048
    $region61: #{gcnt1_forward.1} parent=1 // pred_fallthru
      _
    %809 = vsyncpa [#allocation5], 1
    %810 = vsyncpa [#allocation8], 1
    %811 = vsyncpa [#allocation11], 1
    %812 = vsyncpa [#allocation6], 1
    %813 = vsyncpa [#allocation15], 1
  %814 = vsyncmov [#allocation3]
  %s815 = vpop.sfrf %814
  %p816 = scmp.eq.s32.totalorder %s815, 0
  %p817 = pneg %p816
  %819 = shalt.err (%p817)

</llo_original>
